<compile_context>
chip_gen: v5e
topology: v5e:2x2
jax: 0.10.0
libtpu: 0.0.40
codegen_flags: <defaults>
</compile_context>

<pallas_src>
import jax
import jax.numpy as jnp
from jax.experimental import pallas as pl
from jax.experimental.pallas import tpu as pltpu

D_MODEL = 64
D_K = 64
D_V = 64
N_HEADS = 1
D_FF = 512
LN_EPS = 1e-5
NEG_INF = -1e9


def _layernorm(x):
    # LayerNorm(d_model) created fresh in the PyTorch forward: weight=1, bias=0.
    mu = jnp.mean(x, axis=-1, keepdims=True)
    var = jnp.mean((x - mu) * (x - mu), axis=-1, keepdims=True)
    return (x - mu) * jax.lax.rsqrt(var + LN_EPS)


def decoder_layer_kernel(x_ref, bias_ref, wqkv_ref, wo_ref, w1_ref, w2_ref,
                         out_ref, attn_ref):
    B, Lq, Lk = bias_ref.shape
    Rq = B * Lq

    x_all = x_ref[...]                                  # (B*Lq + B*Lk, 64) f32
    x_bf = x_all.astype(jnp.bfloat16)

    # --- fused Q|K|V projection: one row-stacked (96,64)@(64,192) matmul ---
    qkv = jnp.dot(x_bf, wqkv_ref[...],
                  preferred_element_type=jnp.float32)   # (Rq+Rk, 3*d_k) f32

    q = qkv[:Rq, :D_K].reshape(B, Lq, D_K)              # pep rows -> Q
    k = qkv[Rq:, D_K:2 * D_K].reshape(B, Lk, D_K)       # hla rows -> K
    v = qkv[Rq:, 2 * D_K:].reshape(B, Lk, D_V)          # hla rows -> V

    # --- scaled dot-product attention (contract last dims, additive bias) ---
    scale = 1.0 / jnp.sqrt(jnp.float32(D_K))
    scores = jnp.einsum("bqd,bkd->bqk",
                        q.astype(jnp.bfloat16), k.astype(jnp.bfloat16),
                        preferred_element_type=jnp.float32) * scale
    scores = scores + bias_ref[...]                     # 0 / -1e9 bias

    m = jnp.max(scores, axis=-1, keepdims=True)
    e = jnp.exp(scores - m)
    attn = e / jnp.sum(e, axis=-1, keepdims=True)       # exact: rows sum to 1

    ctx = jnp.einsum("bqk,bkd->bqd",
                     attn.astype(jnp.bfloat16), v.astype(jnp.bfloat16),
                     preferred_element_type=jnp.float32)  # (B, Lq, d_v)

    ctx2 = ctx.reshape(Rq, D_V)
    mha = jnp.dot(ctx2.astype(jnp.bfloat16), wo_ref[...],
                  preferred_element_type=jnp.float32)   # (Rq, d_model)

    # residual (f32 path) + LayerNorm; outer dropout is identity in eval
    pep_f32 = x_all[:Rq, :]
    x1 = _layernorm(mha + pep_f32)

    # --- position-wise FFN ---
    h = jnp.maximum(jnp.dot(x1.astype(jnp.bfloat16), w1_ref[...],
                            preferred_element_type=jnp.float32), 0.0)
    y = jnp.dot(h.astype(jnp.bfloat16), w2_ref[...],
                preferred_element_type=jnp.float32)
    z = _layernorm(y + x1)

    out_ref[...] = z.astype(out_ref.dtype)              # bf16 store
    attn_ref[...] = attn                                # (B, Lq, Lk) f32


def decoder_layer(pep, hla, attn_mask, params):
    """pep: (B, Lq, 64), hla: (B, Lk, 64), attn_mask: (B, Lq, Lk) bool."""
    B, Lq, _ = pep.shape
    Lk = hla.shape[1]

    # Row-stack pep and hla (f32 kept for the residual path inside the kernel).
    x_all = jnp.concatenate(
        [pep.reshape(B * Lq, D_MODEL), hla.reshape(B * Lk, D_MODEL)],
        axis=0).astype(jnp.float32)                     # (B*(Lq+Lk), 64)

    # Additive mask bias built once on the host: 0 where visible, -1e9 masked.
    bias = jnp.where(attn_mask, jnp.float32(NEG_INF),
                     jnp.float32(0.0))                  # (B, Lq, Lk) f32

    # Fused [W_Q | W_K | W_V] weight -> one lane-dense (64, 192) matmul operand.
    wqkv = jnp.concatenate([params["wq"], params["wk"], params["wv"]],
                           axis=1).astype(jnp.bfloat16)
    wo = params["wo"].astype(jnp.bfloat16)
    w1 = params["w1"].astype(jnp.bfloat16)
    w2 = params["w2"].astype(jnp.bfloat16)

    def vmem():
        return pl.BlockSpec(memory_space=pltpu.MemorySpace.VMEM)

    # Total VMEM footprint < 0.5 MiB -> single grid-less invocation; no
    # sharding across TensorCores (too little work to pay for it, per review).
    out_flat, attn = pl.pallas_call(
        decoder_layer_kernel,
        out_shape=(
            jax.ShapeDtypeStruct((B * Lq, D_MODEL), jnp.bfloat16),
            jax.ShapeDtypeStruct((B, Lq, Lk), jnp.float32),
        ),
        in_specs=[vmem() for _ in range(6)],
        out_specs=(vmem(), vmem()),
    )(x_all, bias, wqkv, wo, w1, w2)

    dec_out = out_flat.astype(jnp.float32).reshape(B, Lq, D_MODEL)
    # PyTorch returns attn with explicit head axis: (B, n_heads, Lq, Lk)
    return dec_out, attn[:, None, :, :]


def _reference(pep, hla, attn_mask, params):
    # Pure-JAX f32 reference (eval-mode semantics, dropout = identity).
    q = pep @ params["wq"]
    k = hla @ params["wk"]
    v = hla @ params["wv"]
    scores = jnp.einsum("bqd,bkd->bqk", q, k) / jnp.sqrt(jnp.float32(D_K))
    scores = jnp.where(attn_mask, NEG_INF, scores)
    attn = jax.nn.softmax(scores, axis=-1)
    ctx = jnp.einsum("bqk,bkd->bqd", attn, v)
    out = ctx @ params["wo"]

    def ln(x):
        mu = jnp.mean(x, axis=-1, keepdims=True)
        var = jnp.mean((x - mu) ** 2, axis=-1, keepdims=True)
        return (x - mu) / jnp.sqrt(var + LN_EPS)

    x = ln(out + pep)
    y = jnp.maximum(x @ params["w1"], 0.0) @ params["w2"]
    z = ln(y + x)
    return z, attn[:, None, :, :]


if __name__ == "__main__":
    key = jax.random.PRNGKey(0)
    B, Lq, Lk = 4, 8, 16

    keys = jax.random.split(key, 9)
    pep = jax.random.normal(keys[0], (B, Lq, D_MODEL), jnp.float32)
    hla = jax.random.normal(keys[1], (B, Lk, D_MODEL), jnp.float32)
    # mask out the last few key positions for each batch element
    key_pos = jnp.arange(Lk)[None, None, :]                    # (1,1,Lk)
    attn_mask = jnp.broadcast_to(key_pos >= (Lk - 3), (B, Lq, Lk))

    # Deterministic synthetic weights (stored pre-transposed: x @ W).
    params = {
        "wq": 0.05 * jax.random.normal(keys[2], (D_MODEL, D_K), jnp.float32),
        "wk": 0.05 * jax.random.normal(keys[3], (D_MODEL, D_K), jnp.float32),
        "wv": 0.05 * jax.random.normal(keys[4], (D_MODEL, D_V), jnp.float32),
        "wo": 0.05 * jax.random.normal(keys[5], (D_V, D_MODEL), jnp.float32),
        "w1": 0.05 * jax.random.normal(keys[6], (D_MODEL, D_FF), jnp.float32),
        "w2": 0.05 * jax.random.normal(keys[7], (D_FF, D_MODEL), jnp.float32),
    }

    dec_out, attn = decoder_layer(pep, hla, attn_mask, params)
    jax.block_until_ready((dec_out, attn))

    ref_out, ref_attn = _reference(pep, hla, attn_mask, params)
    assert dec_out.shape == (B, Lq, D_MODEL)
    assert attn.shape == (B, N_HEADS, Lq, Lk)
    # bf16 matmul operands + bf16 output store in the kernel -> relaxed tols.
    assert jnp.allclose(dec_out, ref_out, atol=3e-2, rtol=3e-2)
    assert jnp.allclose(attn, ref_attn, atol=1e-2, rtol=1e-2)

    print("KERNEL_OK")
</pallas_src>

<mosaic_0001>
module attributes {stable_mosaic.version = 11 : i64} {
  func.func @decoder_layer_kernel(%arg0: memref<96x64xf32, #tpu.memory_space<vmem>>, %arg1: memref<4x8x16xf32, #tpu.memory_space<vmem>>, %arg2: memref<64x192xbf16, #tpu.memory_space<vmem>>, %arg3: memref<64x64xbf16, #tpu.memory_space<vmem>>, %arg4: memref<64x512xbf16, #tpu.memory_space<vmem>>, %arg5: memref<512x64xbf16, #tpu.memory_space<vmem>>, %arg6: memref<32x64xbf16, #tpu.memory_space<vmem>>, %arg7: memref<4x8x16xf32, #tpu.memory_space<vmem>>) attributes {dimension_semantics = [], scalar_prefetch = 0 : i64, scratch_operands = 0 : i64, tpu.core_type = #tpu.core_type<tc>} {
    %c0 = arith.constant 0 : index
    %c0_0 = arith.constant 0 : index
    %0 = vector.load %arg0[%c0, %c0_0] : memref<96x64xf32, #tpu.memory_space<vmem>>, vector<96x64xf32>
    %1 = arith.truncf %0 : vector<96x64xf32> to vector<96x64xbf16>
    %c0_1 = arith.constant 0 : index
    %c0_2 = arith.constant 0 : index
    %2 = vector.load %arg2[%c0_1, %c0_2] : memref<64x192xbf16, #tpu.memory_space<vmem>>, vector<64x192xbf16>
    %cst = arith.constant dense<0.000000e+00> : vector<96x192xf32>
    %3 = tpu.matmul %1, %2, %cst {dimension_numbers = #tpu.dot_dimension_numbers<[1], [0], [0], [1], [0, 0, 1, 1], [], []>} : vector<96x64xbf16>, vector<64x192xbf16>, vector<96x192xf32> -> vector<96x192xf32>
    %4 = vector.extract_strided_slice %3 {offsets = [0, 0], sizes = [32, 64], strides = [1, 1]} : vector<96x192xf32> to vector<32x64xf32>
    %5 = vector.shape_cast %4 : vector<32x64xf32> to vector<4x8x64xf32>
    %6 = vector.extract_strided_slice %3 {offsets = [32, 64], sizes = [64, 64], strides = [1, 1]} : vector<96x192xf32> to vector<64x64xf32>
    %7 = vector.shape_cast %6 : vector<64x64xf32> to vector<4x16x64xf32>
    %8 = vector.extract_strided_slice %3 {offsets = [32, 128], sizes = [64, 64], strides = [1, 1]} : vector<96x192xf32> to vector<64x64xf32>
    %9 = vector.shape_cast %8 : vector<64x64xf32> to vector<4x16x64xf32>
    %cst_3 = arith.constant 6.400000e+01 : f32
    %10 = math.sqrt %cst_3 : f32
    %cst_4 = arith.constant 1.000000e+00 : f32
    %11 = arith.divf %cst_4, %10 : f32
    %12 = arith.truncf %5 : vector<4x8x64xf32> to vector<4x8x64xbf16>
    %13 = arith.truncf %7 : vector<4x16x64xf32> to vector<4x16x64xbf16>
    "tpu.trace_start"() <{level = 10 : i32, message = "bqd,bkd->bqk"}> : () -> ()
    %cst_5 = arith.constant dense<0.000000e+00> : vector<4x8x16xf32>
    %14 = tpu.matmul %12, %13, %cst_5 {dimension_numbers = #tpu.dot_dimension_numbers<[2], [2], [1], [1], [0, 0, 0, 1, 1, 1], [0], [0]>} : vector<4x8x64xbf16>, vector<4x16x64xbf16>, vector<4x8x16xf32> -> vector<4x8x16xf32>
    "tpu.trace_stop"() : () -> ()
    %15 = vector.broadcast %11 : f32 to vector<4x8x16xf32>
    %16 = arith.mulf %14, %15 : vector<4x8x16xf32>
    %c0_6 = arith.constant 0 : index
    %c0_7 = arith.constant 0 : index
    %c0_8 = arith.constant 0 : index
    %17 = vector.load %arg1[%c0_6, %c0_7, %c0_8] : memref<4x8x16xf32, #tpu.memory_space<vmem>>, vector<4x8x16xf32>
    %18 = arith.addf %16, %17 : vector<4x8x16xf32>
    %cst_9 = arith.constant dense<0xFF800000> : vector<4x8xf32>
    %19 = vector.multi_reduction <maximumf>, %18, %cst_9 [2] : vector<4x8x16xf32> to vector<4x8xf32>
    %20 = vector.shape_cast %19 : vector<4x8xf32> to vector<4x8x1xf32>
    %21 = vector.broadcast %20 : vector<4x8x1xf32> to vector<4x8x16xf32>
    %22 = arith.subf %18, %21 : vector<4x8x16xf32>
    %23 = math.exp %22 : vector<4x8x16xf32>
    %cst_10 = arith.constant dense<0.000000e+00> : vector<4x8xf32>
    %24 = vector.multi_reduction <add>, %23, %cst_10 [2] : vector<4x8x16xf32> to vector<4x8xf32>
    %25 = vector.shape_cast %24 : vector<4x8xf32> to vector<4x8x1xf32>
    %26 = vector.broadcast %25 : vector<4x8x1xf32> to vector<4x8x16xf32>
    %27 = arith.divf %23, %26 : vector<4x8x16xf32>
    %28 = arith.truncf %27 : vector<4x8x16xf32> to vector<4x8x16xbf16>
    %29 = arith.truncf %9 : vector<4x16x64xf32> to vector<4x16x64xbf16>
    "tpu.trace_start"() <{level = 10 : i32, message = "bqk,bkd->bqd"}> : () -> ()
    %cst_11 = arith.constant dense<0.000000e+00> : vector<4x8x64xf32>
    %30 = tpu.matmul %28, %29, %cst_11 {dimension_numbers = #tpu.dot_dimension_numbers<[2], [1], [1], [2], [0, 0, 0, 1, 1, 2], [0], [0]>} : vector<4x8x16xbf16>, vector<4x16x64xbf16>, vector<4x8x64xf32> -> vector<4x8x64xf32>
    "tpu.trace_stop"() : () -> ()
    %31 = vector.shape_cast %30 : vector<4x8x64xf32> to vector<32x64xf32>
    %32 = arith.truncf %31 : vector<32x64xf32> to vector<32x64xbf16>
    %c0_12 = arith.constant 0 : index
    %c0_13 = arith.constant 0 : index
    %33 = vector.load %arg3[%c0_12, %c0_13] : memref<64x64xbf16, #tpu.memory_space<vmem>>, vector<64x64xbf16>
    %cst_14 = arith.constant dense<0.000000e+00> : vector<32x64xf32>
    %34 = tpu.matmul %32, %33, %cst_14 {dimension_numbers = #tpu.dot_dimension_numbers<[1], [0], [0], [1], [0, 0, 1, 1], [], []>} : vector<32x64xbf16>, vector<64x64xbf16>, vector<32x64xf32> -> vector<32x64xf32>
    %35 = vector.extract_strided_slice %0 {offsets = [0, 0], sizes = [32, 64], strides = [1, 1]} : vector<96x64xf32> to vector<32x64xf32>
    %36 = arith.addf %34, %35 : vector<32x64xf32>
    %cst_15 = arith.constant dense<0.000000e+00> : vector<32xf32>
    %37 = vector.multi_reduction <add>, %36, %cst_15 [1] : vector<32x64xf32> to vector<32xf32>
    %38 = vector.shape_cast %37 : vector<32xf32> to vector<32x1xf32>
    %cst_16 = arith.constant 6.400000e+01 : f32
    %39 = vector.broadcast %cst_16 : f32 to vector<32x1xf32>
    %40 = arith.divf %38, %39 : vector<32x1xf32>
    %41 = vector.broadcast %40 : vector<32x1xf32> to vector<32x64xf32>
    %42 = arith.subf %36, %41 : vector<32x64xf32>
    %43 = vector.broadcast %40 : vector<32x1xf32> to vector<32x64xf32>
    %44 = arith.subf %36, %43 : vector<32x64xf32>
    %45 = arith.mulf %42, %44 : vector<32x64xf32>
    %cst_17 = arith.constant dense<0.000000e+00> : vector<32xf32>
    %46 = vector.multi_reduction <add>, %45, %cst_17 [1] : vector<32x64xf32> to vector<32xf32>
    %47 = vector.shape_cast %46 : vector<32xf32> to vector<32x1xf32>
    %cst_18 = arith.constant 6.400000e+01 : f32
    %48 = vector.broadcast %cst_18 : f32 to vector<32x1xf32>
    %49 = arith.divf %47, %48 : vector<32x1xf32>
    %50 = vector.broadcast %40 : vector<32x1xf32> to vector<32x64xf32>
    %51 = arith.subf %36, %50 : vector<32x64xf32>
    %cst_19 = arith.constant 9.99999974E-6 : f32
    %52 = vector.broadcast %cst_19 : f32 to vector<32x1xf32>
    %53 = arith.addf %49, %52 : vector<32x1xf32>
    %54 = math.rsqrt %53 : vector<32x1xf32>
    %55 = vector.broadcast %54 : vector<32x1xf32> to vector<32x64xf32>
    %56 = arith.mulf %51, %55 : vector<32x64xf32>
    %57 = arith.truncf %56 : vector<32x64xf32> to vector<32x64xbf16>
    %c0_20 = arith.constant 0 : index
    %c0_21 = arith.constant 0 : index
    %58 = vector.load %arg4[%c0_20, %c0_21] : memref<64x512xbf16, #tpu.memory_space<vmem>>, vector<64x512xbf16>
    %cst_22 = arith.constant dense<0.000000e+00> : vector<32x512xf32>
    %59 = tpu.matmul %57, %58, %cst_22 {dimension_numbers = #tpu.dot_dimension_numbers<[1], [0], [0], [1], [0, 0, 1, 1], [], []>} : vector<32x64xbf16>, vector<64x512xbf16>, vector<32x512xf32> -> vector<32x512xf32>
    %cst_23 = arith.constant 0.000000e+00 : f32
    %60 = vector.broadcast %cst_23 : f32 to vector<32x512xf32>
    %61 = arith.maximumf %59, %60 : vector<32x512xf32>
    %62 = arith.truncf %61 : vector<32x512xf32> to vector<32x512xbf16>
    %c0_24 = arith.constant 0 : index
    %c0_25 = arith.constant 0 : index
    %63 = vector.load %arg5[%c0_24, %c0_25] : memref<512x64xbf16, #tpu.memory_space<vmem>>, vector<512x64xbf16>
    %cst_26 = arith.constant dense<0.000000e+00> : vector<32x64xf32>
    %64 = tpu.matmul %62, %63, %cst_26 {dimension_numbers = #tpu.dot_dimension_numbers<[1], [0], [0], [1], [0, 0, 1, 1], [], []>} : vector<32x512xbf16>, vector<512x64xbf16>, vector<32x64xf32> -> vector<32x64xf32>
    %65 = arith.addf %64, %56 : vector<32x64xf32>
    %cst_27 = arith.constant dense<0.000000e+00> : vector<32xf32>
    %66 = vector.multi_reduction <add>, %65, %cst_27 [1] : vector<32x64xf32> to vector<32xf32>
    %67 = vector.shape_cast %66 : vector<32xf32> to vector<32x1xf32>
    %cst_28 = arith.constant 6.400000e+01 : f32
    %68 = vector.broadcast %cst_28 : f32 to vector<32x1xf32>
    %69 = arith.divf %67, %68 : vector<32x1xf32>
    %70 = vector.broadcast %69 : vector<32x1xf32> to vector<32x64xf32>
    %71 = arith.subf %65, %70 : vector<32x64xf32>
    %72 = vector.broadcast %69 : vector<32x1xf32> to vector<32x64xf32>
    %73 = arith.subf %65, %72 : vector<32x64xf32>
    %74 = arith.mulf %71, %73 : vector<32x64xf32>
    %cst_29 = arith.constant dense<0.000000e+00> : vector<32xf32>
    %75 = vector.multi_reduction <add>, %74, %cst_29 [1] : vector<32x64xf32> to vector<32xf32>
    %76 = vector.shape_cast %75 : vector<32xf32> to vector<32x1xf32>
    %cst_30 = arith.constant 6.400000e+01 : f32
    %77 = vector.broadcast %cst_30 : f32 to vector<32x1xf32>
    %78 = arith.divf %76, %77 : vector<32x1xf32>
    %79 = vector.broadcast %69 : vector<32x1xf32> to vector<32x64xf32>
    %80 = arith.subf %65, %79 : vector<32x64xf32>
    %cst_31 = arith.constant 9.99999974E-6 : f32
    %81 = vector.broadcast %cst_31 : f32 to vector<32x1xf32>
    %82 = arith.addf %78, %81 : vector<32x1xf32>
    %83 = math.rsqrt %82 : vector<32x1xf32>
    %84 = vector.broadcast %83 : vector<32x1xf32> to vector<32x64xf32>
    %85 = arith.mulf %80, %84 : vector<32x64xf32>
    %86 = arith.truncf %85 : vector<32x64xf32> to vector<32x64xbf16>
    %c0_32 = arith.constant 0 : index
    %c0_33 = arith.constant 0 : index
    %87 = vector.load %arg6[%c0_32, %c0_33] : memref<32x64xbf16, #tpu.memory_space<vmem>>, vector<32x64xbf16>
    tpu.vector_store %arg6[%c0_32, %c0_33], %86 {strides = array<i32>} : memref<32x64xbf16, #tpu.memory_space<vmem>>, vector<32x64xbf16>,
    %c0_34 = arith.constant 0 : index
    %c0_35 = arith.constant 0 : index
    %c0_36 = arith.constant 0 : index
    %88 = vector.load %arg7[%c0_34, %c0_35, %c0_36] : memref<4x8x16xf32, #tpu.memory_space<vmem>>, vector<4x8x16xf32>
    tpu.vector_store %arg7[%c0_34, %c0_35, %c0_36], %27 {strides = array<i32>} : memref<4x8x16xf32, #tpu.memory_space<vmem>>, vector<4x8x16xf32>,
    return
  }
}

</mosaic_0001>

<llo_original>
// kernel: tpu_custom_call.1
$region0: #{tpu_custom_call.1}
  #allocation0 [shape = 'u32[]', space=smem, size = 0x4, offset = 0x4, fixed_abs, tag = 'smem constant byte address 0x4 - core index']
  #allocation1 [shape = 'u32[72,128]{1,0:T(1,128)}', space=vmem, size = 0x9000, scoped, tag = 'internal scratch']
  %s0 = inlined_call_operand.vmem [shape: f32[96,64], index: 0, kind: input, shape index: {}]
  %s1 = inlined_call_operand.vmem [shape: f32[4,8,16], index: 1, kind: input, shape index: {}]
  %s2 = inlined_call_operand.vmem [shape: bf16[64,192], index: 2, kind: input, shape index: {}]
  %s3 = inlined_call_operand.vmem [shape: bf16[64,64], index: 3, kind: input, shape index: {}]
  %s4 = inlined_call_operand.vmem [shape: bf16[64,512], index: 4, kind: input, shape index: {}]
  %s5 = inlined_call_operand.vmem [shape: bf16[512,64], index: 5, kind: input, shape index: {}]
  %s6 = inlined_call_operand.hbm [shape: bf16[32,64], index: 6, kind: output, shape index: {0}]
  %s7 = inlined_call_operand.hbm [shape: f32[4,8,16], index: 7, kind: output, shape index: {1}]
  %8 = xla_tuple %s6, %s7
  %s9 = sld [smem:[#allocation0]]
  $region42: #{tpu_custom_call.1} parent=0
    _
  %s11 = ssub.s32 1, %s9
  %s12 = scalar_select 0, %s11, %s9
  $region1: #{tpu_custom_call.1} parent=0
    #allocation2 [shape = 'u8[8192]{0}', space=vmem, size = 0x2000, scoped, tag = 'output window, operand 0, single buffered']
    #allocation3 [shape = 's32[1]{0}', space=sflag, size = 0x4, scoped, tag = 'scoped memory for tpu_custom_call.1']
    #allocation4 [shape = 'u8[16384]{0}', space=vmem, size = 0x4000, scoped, tag = 'output window, operand 1, single buffered']
    #allocation5 [shape = 's32[1]{0}', space=sflag, size = 0x4, scoped, tag = 'scoped memory for tpu_custom_call.1']
    %13 = vsyncpa [#allocation3], 0
    %14 = vsyncpa [#allocation5], 0
    // Predicated region
    $region2: #{tpu_custom_call.1} parent=1 // pred_check
      _
    $region3: #{tpu_custom_call.1} parent=1 // pred_check_branch
      %16 = sbr.rel (0) target = $region5
    $region4: #{tpu_custom_call.1} parent=1 // pred_region
      _
    $region5: #{tpu_custom_call.1} parent=1 // pred_fallthru
      _
    // Predicated region
    $region6: #{tpu_custom_call.1} parent=1 // pred_check
      _
    $region7: #{tpu_custom_call.1} parent=1 // pred_check_branch
      %18 = sbr.rel (0) target = $region9
    $region8: #{tpu_custom_call.1} parent=1 // pred_region
      _
    $region9: #{tpu_custom_call.1} parent=1 // pred_fallthru
      _
    // Predicated region
    $region10: #{tpu_custom_call.1} parent=1 // pred_check
      _
    $region11: #{tpu_custom_call.1} parent=1 // pred_check_branch
      %20 = sbr.rel (0) target = $region13
    $region12: #{tpu_custom_call.1} parent=1 // pred_region
      _
    $region13: #{tpu_custom_call.1} parent=1 // pred_fallthru
      _
    // Predicated region
    $region14: #{tpu_custom_call.1} parent=1 // pred_check
      _
    $region15: #{tpu_custom_call.1} parent=1 // pred_check_branch
      %22 = sbr.rel (0) target = $region17
    $region16: #{tpu_custom_call.1} parent=1 // pred_region
      _
    $region17: #{tpu_custom_call.1} parent=1 // pred_fallthru
      _
    // Predicated region
    $region18: #{tpu_custom_call.1} parent=1 // pred_check
      _
    $region19: #{tpu_custom_call.1} parent=1 // pred_check_branch
      %24 = sbr.rel (0) target = $region21
    $region20: #{tpu_custom_call.1} parent=1 // pred_region
      _
    $region21: #{tpu_custom_call.1} parent=1 // pred_fallthru
      _
    // Predicated region
    $region22: #{tpu_custom_call.1} parent=1 // pred_check
      _
    $region23: #{tpu_custom_call.1} parent=1 // pred_check_branch
      %26 = sbr.rel (0) target = $region25
    $region24: #{tpu_custom_call.1} parent=1 // pred_region
      _
    $region25: #{tpu_custom_call.1} parent=1 // pred_fallthru
      _
    %v28 = vld [vmem:[%s0] sm:$0xff]
    %v29 = vld [vmem:[%s0 + $0x8] sm:$0xff]
    %v30 = vld [vmem:[%s0 + $0x10] sm:$0xff]
    %v31 = vld [vmem:[%s0 + $0x18] sm:$0xff]
    %v32 = vld [vmem:[%s0 + $0x20] sm:$0xff]
    %v33 = vld [vmem:[%s0 + $0x28] sm:$0xff]
    %v34 = vld [vmem:[%s0 + $0x30] sm:$0xff]
    %v35 = vld [vmem:[%s0 + $0x38] sm:$0xff]
    %v36 = vld [vmem:[%s0 + $0x40] sm:$0xff]
    %v37 = vld [vmem:[%s0 + $0x48] sm:$0xff]
    %v38 = vld [vmem:[%s0 + $0x50] sm:$0xff]
    %v39 = vld [vmem:[%s0 + $0x58] sm:$0xff]
    %v40 = vpack.c.bf16 %v29, %v28
    %v41 = vpack.c.bf16 %v31, %v30
    %v42 = vpack.c.bf16 %v33, %v32
    %v43 = vpack.c.bf16 %v35, %v34
    %v44 = vpack.c.bf16 %v37, %v36
    %v45 = vpack.c.bf16 %v39, %v38
    %v46 = vld [vmem:[%s2] sm:$0xff]
    %v47 = vld [vmem:[%s2 + $0x8] sm:$0xff]
    %v48 = vld [vmem:[%s2 + $0x10] sm:$0xff]
    %v49 = vld [vmem:[%s2 + $0x18] sm:$0xff]
    %v50 = vld [vmem:[%s2 + $0x20] sm:$0xff]
    %v51 = vld [vmem:[%s2 + $0x28] sm:$0xff]
    %v52 = vld [vmem:[%s2 + $0x30] sm:$0xff]
    %v53 = vld [vmem:[%s2 + $0x38] sm:$0xff]
    %v62 = vunpack.c.l.b16 %v46
    %v63 = vunpack.c.h.b16 %v46
    %v64 = vunpack.c.l.b16 %v47
    %v65 = vunpack.c.h.b16 %v47
    %v66 = vunpack.c.l.b16 %v48
    %v67 = vunpack.c.h.b16 %v48
    %v68 = vunpack.c.l.b16 %v49
    %v69 = vunpack.c.h.b16 %v49
    %v70 = vunpack.c.l.b16 %v50
    %v71 = vunpack.c.h.b16 %v50
    %v72 = vunpack.c.l.b16 %v51
    %v73 = vunpack.c.h.b16 %v51
    %v74 = vunpack.c.l.b16 %v52
    %v75 = vunpack.c.h.b16 %v52
    %v76 = vunpack.c.l.b16 %v53
    %v77 = vunpack.c.h.b16 %v53
    %v78 = vpack.c.b16 %v64, %v62
    %v79 = vpack.c.b16 %v65, %v63
    %v80 = vpack.c.b16 %v68, %v66
    %v81 = vpack.c.b16 %v69, %v67
    %v82 = vpack.c.b16 %v72, %v70
    %v83 = vpack.c.b16 %v73, %v71
    %v84 = vpack.c.b16 %v76, %v74
    %v85 = vpack.c.b16 %v77, %v75
    %vm94 = vcmask 523264
    %v96 = vsel %vm94, %v40, 0
    %v99 = vsel %vm94, %v41, 0
    %v102 = vsel %vm94, %v42, 0
    %v105 = vsel %vm94, %v43, 0
    %v108 = vsel %vm94, %v44, 0
    %v111 = vsel %vm94, %v45, 0
    %113 = vmatpush.bf16.msra.mxu0 0
    %114 = vmatpush.bf16.msra.mxu0 0
    %115 = vmatpush.bf16.msra.mxu0 0
    %116 = vmatpush.bf16.msra.mxu0 0
    %117 = vmatpush.bf16.msra.mxu0 %v84
    %118 = vmatpush.bf16.msra.mxu0 %v82
    %119 = vmatpush.bf16.msra.mxu0 %v80
    %120 = vmatpush.bf16.msra.mxu0 %v78
    %121 = vmatmul.bf16.gmra.mxu0 %v96
    %v122 = vpop.f32.mrf.mxu0
    %v123 = vadd.f32 0.0, %v122
    %v124 = vpop.f32.mrf.mxu0
    %v125 = vadd.f32 0.0, %v124
    %126 = vmatmul.bf16.gmra.mxu0 %v99
    %v127 = vpop.f32.mrf.mxu0
    %v128 = vadd.f32 0.0, %v127
    %v129 = vpop.f32.mrf.mxu0
    %v130 = vadd.f32 0.0, %v129
    %131 = vmatmul.bf16.gmra.mxu0 %v102
    %v132 = vpop.f32.mrf.mxu0
    %v133 = vadd.f32 0.0, %v132
    %v134 = vpop.f32.mrf.mxu0
    %v135 = vadd.f32 0.0, %v134
    %136 = vmatmul.bf16.gmra.mxu0 %v105
    %v137 = vpop.f32.mrf.mxu0
    %v138 = vadd.f32 0.0, %v137
    %v139 = vpop.f32.mrf.mxu0
    %v140 = vadd.f32 0.0, %v139
    %141 = vmatmul.bf16.gmra.mxu0 %v108
    %v142 = vpop.f32.mrf.mxu0
    %v143 = vadd.f32 0.0, %v142
    %v144 = vpop.f32.mrf.mxu0
    %v145 = vadd.f32 0.0, %v144
    %146 = vmatmul.bf16.gmra.mxu0 %v111
    %v147 = vpop.f32.mrf.mxu0
    %v148 = vadd.f32 0.0, %v147
    %v149 = vpop.f32.mrf.mxu0
    %v150 = vadd.f32 0.0, %v149
    %151 = vdwg.mxu0
    %152 = vmatpush.bf16.msra.mxu0 0
    %153 = vmatpush.bf16.msra.mxu0 0
    %154 = vmatpush.bf16.msra.mxu0 0
    %155 = vmatpush.bf16.msra.mxu0 0
    %156 = vmatpush.bf16.msra.mxu0 %v85
    %157 = vmatpush.bf16.msra.mxu0 %v83
    %158 = vmatpush.bf16.msra.mxu0 %v81
    %159 = vmatpush.bf16.msra.mxu0 %v79
    %160 = vmatmul.bf16.gmra.mxu0 %v96
    %v161 = vpop.f32.mrf.mxu0
    %v162 = vpop.f32.mrf.mxu0
    %163 = vmatmul.bf16.gmra.mxu0 %v99
    %v164 = vpop.f32.mrf.mxu0
    %v165 = vpop.f32.mrf.mxu0
    %166 = vmatmul.bf16.gmra.mxu0 %v102
    %v167 = vpop.f32.mrf.mxu0
    %v168 = vadd.f32 0.0, %v167
    %v169 = vpop.f32.mrf.mxu0
    %v170 = vadd.f32 0.0, %v169
    %171 = vmatmul.bf16.gmra.mxu0 %v105
    %v172 = vpop.f32.mrf.mxu0
    %v173 = vadd.f32 0.0, %v172
    %v174 = vpop.f32.mrf.mxu0
    %v175 = vadd.f32 0.0, %v174
    %176 = vmatmul.bf16.gmra.mxu0 %v108
    %v177 = vpop.f32.mrf.mxu0
    %v178 = vadd.f32 0.0, %v177
    %v179 = vpop.f32.mrf.mxu0
    %v180 = vadd.f32 0.0, %v179
    %181 = vmatmul.bf16.gmra.mxu0 %v111
    %v182 = vpop.f32.mrf.mxu0
    %v183 = vadd.f32 0.0, %v182
    %v184 = vpop.f32.mrf.mxu0
    %v185 = vadd.f32 0.0, %v184
    %186 = vdwg.mxu0
    %v187 = vpack.c.bf16 %v123, %v123
    %v188 = vpack.c.bf16 %v125, %v125
    %v189 = vpack.c.bf16 %v128, %v128
    %v190 = vpack.c.bf16 %v130, %v130
    %v191 = vpack.c.bf16 %v133, %v133
    %v192 = vpack.c.bf16 %v135, %v135
    %v193 = vpack.c.bf16 %v138, %v138
    %v194 = vpack.c.bf16 %v140, %v140
    %v195 = vpack.c.bf16 %v143, %v143
    %v196 = vpack.c.bf16 %v145, %v145
    %v197 = vpack.c.bf16 %v148, %v148
    %v198 = vpack.c.bf16 %v150, %v150
    %v201 = vunpack.c.l.b16 %v191
    %v202 = vunpack.c.l.b16 %v192
    %v203 = vpack.c.b16 %v202, %v201
    %204 = vrot.lane.b32.xlu0 %v203, 64
    %v205 = vpop.permute.xlu0 %204
    %v207 = vsel %vm94, %v187, 0
    %v210 = vsel %vm94, %v205, 0
    %212 = vmatpush.bf16.xpose.msra.mxu0 0
    %213 = vmatpush.bf16.xpose.msra.mxu0 0
    %214 = vmatpush.bf16.xpose.msra.mxu0 0
    %215 = vmatpush.bf16.xpose.msra.mxu0 0
    %216 = vmatpush.bf16.xpose.msra.mxu0 0
    %217 = vmatpush.bf16.xpose.msra.mxu0 0
    %218 = vmatpush.bf16.xpose.msra.mxu0 0
    %219 = vmatpush.bf16.xpose.msra.mxu0 %v210
    %220 = vmatmul.bf16.gmra.mxu0 %v207
    %v221 = vpop.f32.mrf.mxu0
    %v222 = vadd.f32 0.0, %v221
    %v223 = vpop.f32.mrf.mxu0
    %224 = vdwg.mxu0
    %v227 = vunpack.c.l.b16 %v193
    %v228 = vunpack.c.l.b16 %v194
    %v229 = vpack.c.b16 %v228, %v227
    %230 = vrot.lane.b32.xlu0 %v229, 64
    %v231 = vpop.permute.xlu0 %230
    %v233 = vsel %vm94, %v188, 0
    %v236 = vsel %vm94, %v231, 0
    %238 = vmatpush.bf16.xpose.msra.mxu0 0
    %239 = vmatpush.bf16.xpose.msra.mxu0 0
    %240 = vmatpush.bf16.xpose.msra.mxu0 0
    %241 = vmatpush.bf16.xpose.msra.mxu0 0
    %242 = vmatpush.bf16.xpose.msra.mxu0 0
    %243 = vmatpush.bf16.xpose.msra.mxu0 0
    %244 = vmatpush.bf16.xpose.msra.mxu0 0
    %245 = vmatpush.bf16.xpose.msra.mxu0 %v236
    %246 = vmatmul.bf16.gmra.mxu0 %v233
    %v247 = vpop.f32.mrf.mxu0
    %v248 = vadd.f32 0.0, %v247
    %v249 = vpop.f32.mrf.mxu0
    %250 = vdwg.mxu0
    %v253 = vunpack.c.l.b16 %v195
    %v254 = vunpack.c.l.b16 %v196
    %v255 = vpack.c.b16 %v254, %v253
    %256 = vrot.lane.b32.xlu0 %v255, 64
    %v257 = vpop.permute.xlu0 %256
    %v259 = vsel %vm94, %v189, 0
    %v262 = vsel %vm94, %v257, 0
    %264 = vmatpush.bf16.xpose.msra.mxu0 0
    %265 = vmatpush.bf16.xpose.msra.mxu0 0
    %266 = vmatpush.bf16.xpose.msra.mxu0 0
    %267 = vmatpush.bf16.xpose.msra.mxu0 0
    %268 = vmatpush.bf16.xpose.msra.mxu0 0
    %269 = vmatpush.bf16.xpose.msra.mxu0 0
    %270 = vmatpush.bf16.xpose.msra.mxu0 0
    %271 = vmatpush.bf16.xpose.msra.mxu0 %v262
    %272 = vmatmul.bf16.gmra.mxu0 %v259
    %v273 = vpop.f32.mrf.mxu0
    %v274 = vadd.f32 0.0, %v273
    %v275 = vpop.f32.mrf.mxu0
    %276 = vdwg.mxu0
    %v279 = vunpack.c.l.b16 %v197
    %v280 = vunpack.c.l.b16 %v198
    %v281 = vpack.c.b16 %v280, %v279
    %282 = vrot.lane.b32.xlu0 %v281, 64
    %v283 = vpop.permute.xlu0 %282
    %v285 = vsel %vm94, %v190, 0
    %v288 = vsel %vm94, %v283, 0
    %290 = vmatpush.bf16.xpose.msra.mxu0 0
    %291 = vmatpush.bf16.xpose.msra.mxu0 0
    %292 = vmatpush.bf16.xpose.msra.mxu0 0
    %293 = vmatpush.bf16.xpose.msra.mxu0 0
    %294 = vmatpush.bf16.xpose.msra.mxu0 0
    %295 = vmatpush.bf16.xpose.msra.mxu0 0
    %296 = vmatpush.bf16.xpose.msra.mxu0 0
    %297 = vmatpush.bf16.xpose.msra.mxu0 %v288
    %298 = vmatmul.bf16.gmra.mxu0 %v285
    %v299 = vpop.f32.mrf.mxu0
    %v300 = vadd.f32 0.0, %v299
    %v301 = vpop.f32.mrf.mxu0
    %302 = vdwg.mxu0
    %v303 = vmul.f32 %v222, 0.125
    %v304 = vmul.f32 %v248, 0.125
    %v305 = vmul.f32 %v274, 0.125
    %v306 = vmul.f32 %v300, 0.125
    %v307 = vld [vmem:[%s1] sm:$0xff]
    %v308 = vld [vmem:[%s1 + $0x8] sm:$0xff]
    %v309 = vld [vmem:[%s1 + $0x10] sm:$0xff]
    %v310 = vld [vmem:[%s1 + $0x18] sm:$0xff]
    %v311 = vadd.f32 %v303, %v307
    %v312 = vadd.f32 %v304, %v308
    %v313 = vadd.f32 %v305, %v309
    %v314 = vadd.f32 %v306, %v310
    %vm315 = vcmask 130048
    %v316 = vsel %vm315, %v311, -inf
    %317 = vmax.xlane.f32.xlu0 %v316
    %v318 = vpop.xlane.xlu0 %317
    %v319 = vsel %vm315, %v312, -inf
    %320 = vmax.xlane.f32.xlu0 %v319
    %v321 = vpop.xlane.xlu0 %320
    %v322 = vsel %vm315, %v313, -inf
    %323 = vmax.xlane.f32.xlu0 %v322
    %v324 = vpop.xlane.xlu0 %323
    %v325 = vsel %vm315, %v314, -inf
    %326 = vmax.xlane.f32.xlu0 %v325
    %v327 = vpop.xlane.xlu0 %326
    %v328 = vsub.f32 %v311, %v318
    %v329 = vsub.f32 %v312, %v321
    %v330 = vsub.f32 %v313, %v324
    %v331 = vsub.f32 %v314, %v327
    %v332 = vmul.f32 %v328, 1.442695
    %v333 = vpow.pop %v332
    %v334 = vmul.f32 %v329, 1.442695
    %v335 = vpow.pop %v334
    %v336 = vmul.f32 %v330, 1.442695
    %v337 = vpow.pop %v336
    %v338 = vmul.f32 %v331, 1.442695
    %v339 = vpow.pop %v338
    %v340 = vsel %vm315, %v333, 0.0
    %341 = vadd.xlane.f32.xlu0 %v340
    %v342 = vpop.xlane.xlu0 %341
    %v343 = vsel %vm315, %v335, 0.0
    %344 = vadd.xlane.f32.xlu0 %v343
    %v345 = vpop.xlane.xlu0 %344
    %v346 = vsel %vm315, %v337, 0.0
    %347 = vadd.xlane.f32.xlu0 %v346
    %v348 = vpop.xlane.xlu0 %347
    %v349 = vsel %vm315, %v339, 0.0
    %350 = vadd.xlane.f32.xlu0 %v349
    %v351 = vpop.xlane.xlu0 %350
    %v352 = vrcp.pop %v342
    %v353 = vmul.f32 %v342, %v352
    %v354 = vsub.f32 1.0, %v353
    %v355 = vmul.f32 %v352, %v354
    %v356 = vadd.f32 %v352, %v355
    %vm357 = vweird.f32 %v342
    %vm358 = vweird.f32 %v352
    %vm359 = vmor %vm357, %vm358
    %v360 = vsel %vm359, %v352, %v356
    %v361 = vand.u32 2147483647, %v342
    %vm362 = vcmp.eq.f32.partialorder %v361, 8.507059e+37
    %v363 = vand.u32 %v342, 2147483648
    %v364 = vor.u32 1.1754944e-38, %v363
    %v365 = vsel %vm362, %v364, %v360
    %v366 = vmul.f32 %v333, %v365
    %v367 = vrcp.pop %v345
    %v368 = vmul.f32 %v345, %v367
    %v369 = vsub.f32 1.0, %v368
    %v370 = vmul.f32 %v367, %v369
    %v371 = vadd.f32 %v367, %v370
    %vm372 = vweird.f32 %v345
    %vm373 = vweird.f32 %v367
    %vm374 = vmor %vm372, %vm373
    %v375 = vsel %vm374, %v367, %v371
    %v376 = vand.u32 2147483647, %v345
    %vm377 = vcmp.eq.f32.partialorder %v376, 8.507059e+37
    %v378 = vand.u32 %v345, 2147483648
    %v379 = vor.u32 1.1754944e-38, %v378
    %v380 = vsel %vm377, %v379, %v375
    %v381 = vmul.f32 %v335, %v380
    %v382 = vrcp.pop %v348
    %v383 = vmul.f32 %v348, %v382
    %v384 = vsub.f32 1.0, %v383
    %v385 = vmul.f32 %v382, %v384
    %v386 = vadd.f32 %v382, %v385
    %vm387 = vweird.f32 %v348
    %vm388 = vweird.f32 %v382
    %vm389 = vmor %vm387, %vm388
    %v390 = vsel %vm389, %v382, %v386
    %v391 = vand.u32 2147483647, %v348
    %vm392 = vcmp.eq.f32.partialorder %v391, 8.507059e+37
    %v393 = vand.u32 %v348, 2147483648
    %v394 = vor.u32 1.1754944e-38, %v393
    %v395 = vsel %vm392, %v394, %v390
    %v396 = vmul.f32 %v337, %v395
    %v397 = vrcp.pop %v351
    %v398 = vmul.f32 %v351, %v397
    %v399 = vsub.f32 1.0, %v398
    %v400 = vmul.f32 %v397, %v399
    %v401 = vadd.f32 %v397, %v400
    %vm402 = vweird.f32 %v351
    %vm403 = vweird.f32 %v397
    %vm404 = vmor %vm402, %vm403
    %v405 = vsel %vm404, %v397, %v401
    %v406 = vand.u32 2147483647, %v351
    %vm407 = vcmp.eq.f32.partialorder %v406, 8.507059e+37
    %v408 = vand.u32 %v351, 2147483648
    %v409 = vor.u32 1.1754944e-38, %v408
    %v410 = vsel %vm407, %v409, %v405
    %v411 = vmul.f32 %v339, %v410
    %v412 = vpack.c.bf16 %v366, %v366
    %v413 = vpack.c.bf16 %v381, %v381
    %v414 = vpack.c.bf16 %v396, %v396
    %v415 = vpack.c.bf16 %v411, %v411
    %v416 = vpack.c.bf16 %v168, %v168
    %v417 = vpack.c.bf16 %v170, %v170
    %v418 = vpack.c.bf16 %v173, %v173
    %v419 = vpack.c.bf16 %v175, %v175
    %v420 = vpack.c.bf16 %v178, %v178
    %v421 = vpack.c.bf16 %v180, %v180
    %v422 = vpack.c.bf16 %v183, %v183
    %v423 = vpack.c.bf16 %v185, %v185
    %v426 = vunpack.c.l.b16 %v416
    %v427 = vunpack.c.l.b16 %v417
    %v428 = vpack.c.b16 %v427, %v426
    %v431 = vsel %vm315, %v412, 0
    %433 = vmatpush.bf16.msra.mxu0 0
    %434 = vmatpush.bf16.msra.mxu0 0
    %435 = vmatpush.bf16.msra.mxu0 0
    %436 = vmatpush.bf16.msra.mxu0 0
    %437 = vmatpush.bf16.msra.mxu0 0
    %438 = vmatpush.bf16.msra.mxu0 0
    %439 = vmatpush.bf16.msra.mxu0 0
    %440 = vmatpush.bf16.msra.mxu0 %v428
    %441 = vmatmul.bf16.gmra.mxu0 %v431
    %v442 = vpop.f32.mrf.mxu0
    %v443 = vadd.f32 0.0, %v442
    %v444 = vpop.f32.mrf.mxu0
    %445 = vdwg.mxu0
    %v448 = vunpack.c.l.b16 %v418
    %v449 = vunpack.c.l.b16 %v419
    %v450 = vpack.c.b16 %v449, %v448
    %v453 = vsel %vm315, %v413, 0
    %455 = vmatpush.bf16.msra.mxu0 0
    %456 = vmatpush.bf16.msra.mxu0 0
    %457 = vmatpush.bf16.msra.mxu0 0
    %458 = vmatpush.bf16.msra.mxu0 0
    %459 = vmatpush.bf16.msra.mxu0 0
    %460 = vmatpush.bf16.msra.mxu0 0
    %461 = vmatpush.bf16.msra.mxu0 0
    %462 = vmatpush.bf16.msra.mxu0 %v450
    %463 = vmatmul.bf16.gmra.mxu0 %v453
    %v464 = vpop.f32.mrf.mxu0
    %v465 = vadd.f32 0.0, %v464
    %v466 = vpop.f32.mrf.mxu0
    %467 = vdwg.mxu0
    %v470 = vunpack.c.l.b16 %v420
    %v471 = vunpack.c.l.b16 %v421
    %v472 = vpack.c.b16 %v471, %v470
    %v475 = vsel %vm315, %v414, 0
    %477 = vmatpush.bf16.msra.mxu0 0
    %478 = vmatpush.bf16.msra.mxu0 0
    %479 = vmatpush.bf16.msra.mxu0 0
    %480 = vmatpush.bf16.msra.mxu0 0
    %481 = vmatpush.bf16.msra.mxu0 0
    %482 = vmatpush.bf16.msra.mxu0 0
    %483 = vmatpush.bf16.msra.mxu0 0
    %484 = vmatpush.bf16.msra.mxu0 %v472
    %485 = vmatmul.bf16.gmra.mxu0 %v475
    %v486 = vpop.f32.mrf.mxu0
    %v487 = vadd.f32 0.0, %v486
    %v488 = vpop.f32.mrf.mxu0
    %489 = vdwg.mxu0
    %v492 = vunpack.c.l.b16 %v422
    %v493 = vunpack.c.l.b16 %v423
    %v494 = vpack.c.b16 %v493, %v492
    %v497 = vsel %vm315, %v415, 0
    %499 = vmatpush.bf16.msra.mxu0 0
    %500 = vmatpush.bf16.msra.mxu0 0
    %501 = vmatpush.bf16.msra.mxu0 0
    %502 = vmatpush.bf16.msra.mxu0 0
    %503 = vmatpush.bf16.msra.mxu0 0
    %504 = vmatpush.bf16.msra.mxu0 0
    %505 = vmatpush.bf16.msra.mxu0 0
    %506 = vmatpush.bf16.msra.mxu0 %v494
    %507 = vmatmul.bf16.gmra.mxu0 %v497
    %v508 = vpop.f32.mrf.mxu0
    %v509 = vadd.f32 0.0, %v508
    %v510 = vpop.f32.mrf.mxu0
    %511 = vdwg.mxu0
    %v512 = vpack.c.bf16 %v465, %v443
    %v513 = vpack.c.bf16 %v509, %v487
    %v514 = vld [vmem:[%s3] sm:$0xf]
    %v515 = vld [vmem:[%s3 + $0x4] sm:$0xf]
    %v516 = vld [vmem:[%s3 + $0x8] sm:$0xf]
    %v517 = vld [vmem:[%s3 + $0xc] sm:$0xf]
    %v518 = vld [vmem:[%s3 + $0x10] sm:$0xf]
    %v519 = vld [vmem:[%s3 + $0x14] sm:$0xf]
    %v520 = vld [vmem:[%s3 + $0x18] sm:$0xf]
    %v521 = vld [vmem:[%s3 + $0x1c] sm:$0xf]
    %v530 = vunpack.c.l.b16 %v514
    %v531 = vunpack.c.l.b16 %v515
    %v532 = vunpack.c.l.b16 %v516
    %v533 = vunpack.c.l.b16 %v517
    %v534 = vunpack.c.l.b16 %v518
    %v535 = vunpack.c.l.b16 %v519
    %v536 = vunpack.c.l.b16 %v520
    %v537 = vunpack.c.l.b16 %v521
    %v538 = vpack.c.b16 %v531, %v530
    %v539 = vpack.c.b16 %v533, %v532
    %v540 = vpack.c.b16 %v535, %v534
    %v541 = vpack.c.b16 %v537, %v536
    %v547 = vsel %vm94, %v512, 0
    %v550 = vsel %vm94, %v513, 0
    %552 = vmatpush.bf16.msra.mxu0 0
    %553 = vmatpush.bf16.msra.mxu0 0
    %554 = vmatpush.bf16.msra.mxu0 0
    %555 = vmatpush.bf16.msra.mxu0 0
    %556 = vmatpush.bf16.msra.mxu0 %v541
    %557 = vmatpush.bf16.msra.mxu0 %v540
    %558 = vmatpush.bf16.msra.mxu0 %v539
    %559 = vmatpush.bf16.msra.mxu0 %v538
    %560 = vmatmul.bf16.gmra.mxu0 %v547
    %v561 = vpop.f32.mrf.mxu0
    %v562 = vadd.f32 %v28, %v561
    %v563 = vpop.f32.mrf.mxu0
    %v564 = vadd.f32 %v29, %v563
    %565 = vmatmul.bf16.gmra.mxu0 %v550
    %v566 = vpop.f32.mrf.mxu0
    %v567 = vadd.f32 %v30, %v566
    %v568 = vpop.f32.mrf.mxu0
    %v569 = vadd.f32 %v31, %v568
    %570 = vdwg.mxu0
    %v571 = vsel %vm94, %v562, 0.0
    %572 = vadd.xlane.f32.xlu0 %v571
    %v573 = vpop.xlane.xlu0 %572
    %v574 = vsel %vm94, %v564, 0.0
    %575 = vadd.xlane.f32.xlu0 %v574
    %v576 = vpop.xlane.xlu0 %575
    %v577 = vsel %vm94, %v567, 0.0
    %578 = vadd.xlane.f32.xlu0 %v577
    %v579 = vpop.xlane.xlu0 %578
    %v580 = vsel %vm94, %v569, 0.0
    %581 = vadd.xlane.f32.xlu0 %v580
    %v582 = vpop.xlane.xlu0 %581
    %v583 = vrcp.pop 64.0
    %v584 = vmul.f32 64.0, %v583
    %v585 = vsub.f32 1.0, %v584
    %v586 = vmul.f32 %v583, %v585
    %v587 = vadd.f32 %v583, %v586
    %vm588 = vweird.f32 %v583
    %v589 = vsel %vm588, %v583, %v587
    %v590 = vmul.f32 %v573, %v589
    %v591 = vmul.f32 %v576, %v589
    %v592 = vmul.f32 %v579, %v589
    %v593 = vmul.f32 %v582, %v589
    %v594 = vsub.f32 %v562, %v590
    %v595 = vsub.f32 %v564, %v591
    %v596 = vsub.f32 %v567, %v592
    %v597 = vsub.f32 %v569, %v593
    %v598 = vmul.f32 %v594, %v594
    %v599 = vmul.f32 %v595, %v595
    %v600 = vmul.f32 %v596, %v596
    %v601 = vmul.f32 %v597, %v597
    %v602 = vsel %vm94, %v598, 0.0
    %603 = vadd.xlane.f32.xlu0 %v602
    %v604 = vpop.xlane.xlu0 %603
    %v605 = vsel %vm94, %v599, 0.0
    %606 = vadd.xlane.f32.xlu0 %v605
    %v607 = vpop.xlane.xlu0 %606
    %v608 = vsel %vm94, %v600, 0.0
    %609 = vadd.xlane.f32.xlu0 %v608
    %v610 = vpop.xlane.xlu0 %609
    %v611 = vsel %vm94, %v601, 0.0
    %612 = vadd.xlane.f32.xlu0 %v611
    %v613 = vpop.xlane.xlu0 %612
    %v614 = vmul.f32 %v604, %v589
    %v615 = vmul.f32 %v607, %v589
    %v616 = vmul.f32 %v610, %v589
    %v617 = vmul.f32 %v613, %v589
    %v618 = vadd.f32 %v614, 1e-05
    %v619 = vadd.f32 %v615, 1e-05
    %v620 = vadd.f32 %v616, 1e-05
    %v621 = vadd.f32 %v617, 1e-05
    %v622 = vrsqrt.pop %v618
    %v623 = vmul.f32 %v622, %v618
    %v624 = vmul.f32 %v623, %v622
    %v625 = vmul.f32 0.5, %v624
    %v626 = vsub.f32 1.5, %v625
    %v627 = vmul.f32 %v622, %v626
    %vm628 = vweird.f32 %v618
    %vm629 = vweird.f32 %v622
    %vm630 = vmor %vm628, %vm629
    %v631 = vsel %vm630, %v622, %v627
    %v632 = vrsqrt.pop %v619
    %v633 = vmul.f32 %v632, %v619
    %v634 = vmul.f32 %v633, %v632
    %v635 = vmul.f32 0.5, %v634
    %v636 = vsub.f32 1.5, %v635
    %v637 = vmul.f32 %v632, %v636
    %vm638 = vweird.f32 %v619
    %vm639 = vweird.f32 %v632
    %vm640 = vmor %vm638, %vm639
    %v641 = vsel %vm640, %v632, %v637
    %v642 = vrsqrt.pop %v620
    %v643 = vmul.f32 %v642, %v620
    %v644 = vmul.f32 %v643, %v642
    %v645 = vmul.f32 0.5, %v644
    %v646 = vsub.f32 1.5, %v645
    %v647 = vmul.f32 %v642, %v646
    %vm648 = vweird.f32 %v620
    %vm649 = vweird.f32 %v642
    %vm650 = vmor %vm648, %vm649
    %v651 = vsel %vm650, %v642, %v647
    %v652 = vrsqrt.pop %v621
    %v653 = vmul.f32 %v652, %v621
    %v654 = vmul.f32 %v653, %v652
    %v655 = vmul.f32 0.5, %v654
    %v656 = vsub.f32 1.5, %v655
    %v657 = vmul.f32 %v652, %v656
    %vm658 = vweird.f32 %v621
    %vm659 = vweird.f32 %v652
    %vm660 = vmor %vm658, %vm659
    %v661 = vsel %vm660, %v652, %v657
    %v662 = vmul.f32 %v594, %v631
    %v663 = vmul.f32 %v595, %v641
    %v664 = vmul.f32 %v596, %v651
    %v665 = vmul.f32 %v597, %v661
    %v666 = vpack.c.bf16 %v663, %v662
    %v667 = vpack.c.bf16 %v665, %v664
    %v668 = vld [vmem:[%s4] sm:$0xff]
    %v669 = vld [vmem:[%s4 + $0x8] sm:$0xff]
    %v670 = vld [vmem:[%s4 + $0x10] sm:$0xff]
    %v671 = vld [vmem:[%s4 + $0x18] sm:$0xff]
    %v672 = vld [vmem:[%s4 + $0x20] sm:$0xff]
    %v673 = vld [vmem:[%s4 + $0x28] sm:$0xff]
    %v674 = vld [vmem:[%s4 + $0x30] sm:$0xff]
    %v675 = vld [vmem:[%s4 + $0x38] sm:$0xff]
    %v676 = vld [vmem:[%s4 + $0x40] sm:$0xff]
    %v677 = vld [vmem:[%s4 + $0x48] sm:$0xff]
    %v678 = vld [vmem:[%s4 + $0x50] sm:$0xff]
    %v679 = vld [vmem:[%s4 + $0x58] sm:$0xff]
    %v680 = vld [vmem:[%s4 + $0x60] sm:$0xff]
    %v681 = vld [vmem:[%s4 + $0x68] sm:$0xff]
    %v682 = vld [vmem:[%s4 + $0x70] sm:$0xff]
    %v683 = vld [vmem:[%s4 + $0x78] sm:$0xff]
    %v700 = vunpack.c.l.b16 %v668
    %v701 = vunpack.c.h.b16 %v668
    %v702 = vunpack.c.l.b16 %v669
    %v703 = vunpack.c.h.b16 %v669
    %v704 = vunpack.c.l.b16 %v670
    %v705 = vunpack.c.h.b16 %v670
    %v706 = vunpack.c.l.b16 %v671
    %v707 = vunpack.c.h.b16 %v671
    %v708 = vunpack.c.l.b16 %v672
    %v709 = vunpack.c.h.b16 %v672
    %v710 = vunpack.c.l.b16 %v673
    %v711 = vunpack.c.h.b16 %v673
    %v712 = vunpack.c.l.b16 %v674
    %v713 = vunpack.c.h.b16 %v674
    %v714 = vunpack.c.l.b16 %v675
    %v715 = vunpack.c.h.b16 %v675
    %v716 = vunpack.c.l.b16 %v676
    %v717 = vunpack.c.h.b16 %v676
    %v718 = vunpack.c.l.b16 %v677
    %v719 = vunpack.c.h.b16 %v677
    %v720 = vunpack.c.l.b16 %v678
    %v721 = vunpack.c.h.b16 %v678
    %v722 = vunpack.c.l.b16 %v679
    %v723 = vunpack.c.h.b16 %v679
    %v724 = vunpack.c.l.b16 %v680
    %v725 = vunpack.c.h.b16 %v680
    %v726 = vunpack.c.l.b16 %v681
    %v727 = vunpack.c.h.b16 %v681
    %v728 = vunpack.c.l.b16 %v682
    %v729 = vunpack.c.h.b16 %v682
    %v730 = vunpack.c.l.b16 %v683
    %v731 = vunpack.c.h.b16 %v683
    %v732 = vpack.c.b16 %v704, %v700
    %v733 = vpack.c.b16 %v705, %v701
    %v734 = vpack.c.b16 %v706, %v702
    %v735 = vpack.c.b16 %v707, %v703
    %v736 = vpack.c.b16 %v712, %v708
    %v737 = vpack.c.b16 %v713, %v709
    %v738 = vpack.c.b16 %v714, %v710
    %v739 = vpack.c.b16 %v715, %v711
    %v740 = vpack.c.b16 %v720, %v716
    %v741 = vpack.c.b16 %v721, %v717
    %v742 = vpack.c.b16 %v722, %v718
    %v743 = vpack.c.b16 %v723, %v719
    %v744 = vpack.c.b16 %v728, %v724
    %v745 = vpack.c.b16 %v729, %v725
    %v746 = vpack.c.b16 %v730, %v726
    %v747 = vpack.c.b16 %v731, %v727
    %v765 = vsel %vm94, %v666, 0
    %v768 = vsel %vm94, %v667, 0
    %770 = vmatpush.bf16.msra.mxu0 0
    %771 = vmatpush.bf16.msra.mxu0 0
    %772 = vmatpush.bf16.msra.mxu0 0
    %773 = vmatpush.bf16.msra.mxu0 0
    %774 = vmatpush.bf16.msra.mxu0 %v744
    %775 = vmatpush.bf16.msra.mxu0 %v740
    %776 = vmatpush.bf16.msra.mxu0 %v736
    %777 = vmatpush.bf16.msra.mxu0 %v732
    %778 = vmatmul.bf16.gmra.mxu0 %v765
    %v779 = vpop.f32.mrf.mxu0
    %v780 = vadd.f32 0.0, %v779
    %v781 = vpop.f32.mrf.mxu0
    %v782 = vadd.f32 0.0, %v781
    %783 = vmatmul.bf16.gmra.mxu0 %v768
    %v784 = vpop.f32.mrf.mxu0
    %v785 = vadd.f32 0.0, %v784
    %v786 = vpop.f32.mrf.mxu0
    %v787 = vadd.f32 0.0, %v786
    %788 = vdwg.mxu0
    %789 = vmatpush.bf16.msra.mxu0 0
    %790 = vmatpush.bf16.msra.mxu0 0
    %791 = vmatpush.bf16.msra.mxu0 0
    %792 = vmatpush.bf16.msra.mxu0 0
    %793 = vmatpush.bf16.msra.mxu0 %v745
    %794 = vmatpush.bf16.msra.mxu0 %v741
    %795 = vmatpush.bf16.msra.mxu0 %v737
    %796 = vmatpush.bf16.msra.mxu0 %v733
    %797 = vmatmul.bf16.gmra.mxu0 %v765
    %v798 = vpop.f32.mrf.mxu0
    %v799 = vadd.f32 0.0, %v798
    %v800 = vpop.f32.mrf.mxu0
    %v801 = vadd.f32 0.0, %v800
    %802 = vmatmul.bf16.gmra.mxu0 %v768
    %v803 = vpop.f32.mrf.mxu0
    %v804 = vadd.f32 0.0, %v803
    %v805 = vpop.f32.mrf.mxu0
    %v806 = vadd.f32 0.0, %v805
    %807 = vdwg.mxu0
    %808 = vmatpush.bf16.msra.mxu0 0
    %809 = vmatpush.bf16.msra.mxu0 0
    %810 = vmatpush.bf16.msra.mxu0 0
    %811 = vmatpush.bf16.msra.mxu0 0
    %812 = vmatpush.bf16.msra.mxu0 %v746
    %813 = vmatpush.bf16.msra.mxu0 %v742
    %814 = vmatpush.bf16.msra.mxu0 %v738
    %815 = vmatpush.bf16.msra.mxu0 %v734
    %816 = vmatmul.bf16.gmra.mxu0 %v765
    %v817 = vpop.f32.mrf.mxu0
    %v818 = vadd.f32 0.0, %v817
    %v819 = vpop.f32.mrf.mxu0
    %v820 = vadd.f32 0.0, %v819
    %821 = vmatmul.bf16.gmra.mxu0 %v768
    %v822 = vpop.f32.mrf.mxu0
    %v823 = vadd.f32 0.0, %v822
    %v824 = vpop.f32.mrf.mxu0
    %v825 = vadd.f32 0.0, %v824
    %826 = vdwg.mxu0
    %827 = vmatpush.bf16.msra.mxu0 0
    %828 = vmatpush.bf16.msra.mxu0 0
    %829 = vmatpush.bf16.msra.mxu0 0
    %830 = vmatpush.bf16.msra.mxu0 0
    %831 = vmatpush.bf16.msra.mxu0 %v747
    %832 = vmatpush.bf16.msra.mxu0 %v743
    %833 = vmatpush.bf16.msra.mxu0 %v739
    %834 = vmatpush.bf16.msra.mxu0 %v735
    %835 = vmatmul.bf16.gmra.mxu0 %v765
    %v836 = vpop.f32.mrf.mxu0
    %v837 = vadd.f32 0.0, %v836
    %v838 = vpop.f32.mrf.mxu0
    %v839 = vadd.f32 0.0, %v838
    %840 = vmatmul.bf16.gmra.mxu0 %v768
    %v841 = vpop.f32.mrf.mxu0
    %v842 = vadd.f32 0.0, %v841
    %v843 = vpop.f32.mrf.mxu0
    %v844 = vadd.f32 0.0, %v843
    %845 = vdwg.mxu0
    %v846 = vmax.f32 %v780, 0.0
    %v847 = vmax.f32 %v799, 0.0
    %v848 = vmax.f32 %v818, 0.0
    %v849 = vmax.f32 %v837, 0.0
    %v850 = vmax.f32 %v782, 0.0
    %v851 = vmax.f32 %v801, 0.0
    %v852 = vmax.f32 %v820, 0.0
    %v853 = vmax.f32 %v839, 0.0
    %v854 = vmax.f32 %v785, 0.0
    %v855 = vmax.f32 %v804, 0.0
    %v856 = vmax.f32 %v823, 0.0
    %v857 = vmax.f32 %v842, 0.0
    %v858 = vmax.f32 %v787, 0.0
    %v859 = vmax.f32 %v806, 0.0
    %v860 = vmax.f32 %v825, 0.0
    %v861 = vmax.f32 %v844, 0.0
    %v862 = vpack.c.bf16 %v850, %v846
    %v863 = vpack.c.bf16 %v851, %v847
    %v864 = vpack.c.bf16 %v852, %v848
    %v865 = vpack.c.bf16 %v853, %v849
    %v866 = vpack.c.bf16 %v858, %v854
    %v867 = vpack.c.bf16 %v859, %v855
    %v868 = vpack.c.bf16 %v860, %v856
    %v869 = vpack.c.bf16 %v861, %v857
    %v870 = vld [vmem:[%s5] sm:$0xf]
    %v871 = vld [vmem:[%s5 + $0x4] sm:$0xf]
    %v872 = vld [vmem:[%s5 + $0x8] sm:$0xf]
    %v873 = vld [vmem:[%s5 + $0xc] sm:$0xf]
    %v874 = vld [vmem:[%s5 + $0x10] sm:$0xf]
    %v875 = vld [vmem:[%s5 + $0x14] sm:$0xf]
    %v876 = vld [vmem:[%s5 + $0x18] sm:$0xf]
    %v877 = vld [vmem:[%s5 + $0x1c] sm:$0xf]
    %v878 = vld [vmem:[%s5 + $0x20] sm:$0xf]
    %v879 = vld [vmem:[%s5 + $0x24] sm:$0xf]
    %v880 = vld [vmem:[%s5 + $0x28] sm:$0xf]
    %v881 = vld [vmem:[%s5 + $0x2c] sm:$0xf]
    %v882 = vld [vmem:[%s5 + $0x30] sm:$0xf]
    %v883 = vld [vmem:[%s5 + $0x34] sm:$0xf]
    %v884 = vld [vmem:[%s5 + $0x38] sm:$0xf]
    %v885 = vld [vmem:[%s5 + $0x3c] sm:$0xf]
    %v886 = vld [vmem:[%s5 + $0x40] sm:$0xf]
    %v887 = vld [vmem:[%s5 + $0x44] sm:$0xf]
    %v888 = vld [vmem:[%s5 + $0x48] sm:$0xf]
    %v889 = vld [vmem:[%s5 + $0x4c] sm:$0xf]
    %v890 = vld [vmem:[%s5 + $0x50] sm:$0xf]
    %v891 = vld [vmem:[%s5 + $0x54] sm:$0xf]
    %v892 = vld [vmem:[%s5 + $0x58] sm:$0xf]
    %v893 = vld [vmem:[%s5 + $0x5c] sm:$0xf]
    %v894 = vld [vmem:[%s5 + $0x60] sm:$0xf]
    %v895 = vld [vmem:[%s5 + $0x64] sm:$0xf]
    %v896 = vld [vmem:[%s5 + $0x68] sm:$0xf]
    %v897 = vld [vmem:[%s5 + $0x6c] sm:$0xf]
    %v898 = vld [vmem:[%s5 + $0x70] sm:$0xf]
    %v899 = vld [vmem:[%s5 + $0x74] sm:$0xf]
    %v900 = vld [vmem:[%s5 + $0x78] sm:$0xf]
    %v901 = vld [vmem:[%s5 + $0x7c] sm:$0xf]
    %v902 = vld [vmem:[%s5 + $0x80] sm:$0xf]
    %v903 = vld [vmem:[%s5 + $0x84] sm:$0xf]
    %v904 = vld [vmem:[%s5 + $0x88] sm:$0xf]
    %v905 = vld [vmem:[%s5 + $0x8c] sm:$0xf]
    %v906 = vld [vmem:[%s5 + $0x90] sm:$0xf]
    %v907 = vld [vmem:[%s5 + $0x94] sm:$0xf]
    %v908 = vld [vmem:[%s5 + $0x98] sm:$0xf]
    %v909 = vld [vmem:[%s5 + $0x9c] sm:$0xf]
    %v910 = vld [vmem:[%s5 + $0xa0] sm:$0xf]
    %v911 = vld [vmem:[%s5 + $0xa4] sm:$0xf]
    %v912 = vld [vmem:[%s5 + $0xa8] sm:$0xf]
    %v913 = vld [vmem:[%s5 + $0xac] sm:$0xf]
    %v914 = vld [vmem:[%s5 + $0xb0] sm:$0xf]
    %v915 = vld [vmem:[%s5 + $0xb4] sm:$0xf]
    %v916 = vld [vmem:[%s5 + $0xb8] sm:$0xf]
    %v917 = vld [vmem:[%s5 + $0xbc] sm:$0xf]
    %v918 = vld [vmem:[%s5 + $0xc0] sm:$0xf]
    %v919 = vld [vmem:[%s5 + $0xc4] sm:$0xf]
    %v920 = vld [vmem:[%s5 + $0xc8] sm:$0xf]
    %v921 = vld [vmem:[%s5 + $0xcc] sm:$0xf]
    %v922 = vld [vmem:[%s5 + $0xd0] sm:$0xf]
    %v923 = vld [vmem:[%s5 + $0xd4] sm:$0xf]
    %v924 = vld [vmem:[%s5 + $0xd8] sm:$0xf]
    %v925 = vld [vmem:[%s5 + $0xdc] sm:$0xf]
    %v926 = vld [vmem:[%s5 + $0xe0] sm:$0xf]
    %v927 = vld [vmem:[%s5 + $0xe4] sm:$0xf]
    %v928 = vld [vmem:[%s5 + $0xe8] sm:$0xf]
    %v929 = vld [vmem:[%s5 + $0xec] sm:$0xf]
    %v930 = vld [vmem:[%s5 + $0xf0] sm:$0xf]
    %v931 = vld [vmem:[%s5 + $0xf4] sm:$0xf]
    %v932 = vld [vmem:[%s5 + $0xf8] sm:$0xf]
    %v933 = vld [vmem:[%s5 + $0xfc] sm:$0xf]
    %v998 = vunpack.c.l.b16 %v870
    %v999 = vunpack.c.l.b16 %v871
    %v1000 = vunpack.c.l.b16 %v872
    %v1001 = vunpack.c.l.b16 %v873
    %v1002 = vunpack.c.l.b16 %v874
    %v1003 = vunpack.c.l.b16 %v875
    %v1004 = vunpack.c.l.b16 %v876
    %v1005 = vunpack.c.l.b16 %v877
    %v1006 = vunpack.c.l.b16 %v878
    %v1007 = vunpack.c.l.b16 %v879
    %v1008 = vunpack.c.l.b16 %v880
    %v1009 = vunpack.c.l.b16 %v881
    %v1010 = vunpack.c.l.b16 %v882
    %v1011 = vunpack.c.l.b16 %v883
    %v1012 = vunpack.c.l.b16 %v884
    %v1013 = vunpack.c.l.b16 %v885
    %v1014 = vunpack.c.l.b16 %v886
    %v1015 = vunpack.c.l.b16 %v887
    %v1016 = vunpack.c.l.b16 %v888
    %v1017 = vunpack.c.l.b16 %v889
    %v1018 = vunpack.c.l.b16 %v890
    %v1019 = vunpack.c.l.b16 %v891
    %v1020 = vunpack.c.l.b16 %v892
    %v1021 = vunpack.c.l.b16 %v893
    %v1022 = vunpack.c.l.b16 %v894
    %v1023 = vunpack.c.l.b16 %v895
    %v1024 = vunpack.c.l.b16 %v896
    %v1025 = vunpack.c.l.b16 %v897
    %v1026 = vunpack.c.l.b16 %v898
    %v1027 = vunpack.c.l.b16 %v899
    %v1028 = vunpack.c.l.b16 %v900
    %v1029 = vunpack.c.l.b16 %v901
    %v1030 = vunpack.c.l.b16 %v902
    %v1031 = vunpack.c.l.b16 %v903
    %v1032 = vunpack.c.l.b16 %v904
    %v1033 = vunpack.c.l.b16 %v905
    %v1034 = vunpack.c.l.b16 %v906
    %v1035 = vunpack.c.l.b16 %v907
    %v1036 = vunpack.c.l.b16 %v908
    %v1037 = vunpack.c.l.b16 %v909
    %v1038 = vunpack.c.l.b16 %v910
    %v1039 = vunpack.c.l.b16 %v911
    %v1040 = vunpack.c.l.b16 %v912
    %v1041 = vunpack.c.l.b16 %v913
    %v1042 = vunpack.c.l.b16 %v914
    %v1043 = vunpack.c.l.b16 %v915
    %v1044 = vunpack.c.l.b16 %v916
    %v1045 = vunpack.c.l.b16 %v917
    %v1046 = vunpack.c.l.b16 %v918
    %v1047 = vunpack.c.l.b16 %v919
    %v1048 = vunpack.c.l.b16 %v920
    %v1049 = vunpack.c.l.b16 %v921
    %v1050 = vunpack.c.l.b16 %v922
    %v1051 = vunpack.c.l.b16 %v923
    %v1052 = vunpack.c.l.b16 %v924
    %v1053 = vunpack.c.l.b16 %v925
    %v1054 = vunpack.c.l.b16 %v926
    %v1055 = vunpack.c.l.b16 %v927
    %v1056 = vunpack.c.l.b16 %v928
    %v1057 = vunpack.c.l.b16 %v929
    %v1058 = vunpack.c.l.b16 %v930
    %v1059 = vunpack.c.l.b16 %v931
    %v1060 = vunpack.c.l.b16 %v932
    %v1061 = vunpack.c.l.b16 %v933
    %v1062 = vpack.c.b16 %v999, %v998
    %v1063 = vpack.c.b16 %v1001, %v1000
    %v1064 = vpack.c.b16 %v1003, %v1002
    %v1065 = vpack.c.b16 %v1005, %v1004
    %v1066 = vpack.c.b16 %v1007, %v1006
    %v1067 = vpack.c.b16 %v1009, %v1008
    %v1068 = vpack.c.b16 %v1011, %v1010
    %v1069 = vpack.c.b16 %v1013, %v1012
    %v1070 = vpack.c.b16 %v1015, %v1014
    %v1071 = vpack.c.b16 %v1017, %v1016
    %v1072 = vpack.c.b16 %v1019, %v1018
    %v1073 = vpack.c.b16 %v1021, %v1020
    %v1074 = vpack.c.b16 %v1023, %v1022
    %v1075 = vpack.c.b16 %v1025, %v1024
    %v1076 = vpack.c.b16 %v1027, %v1026
    %v1077 = vpack.c.b16 %v1029, %v1028
    %v1078 = vpack.c.b16 %v1031, %v1030
    %v1079 = vpack.c.b16 %v1033, %v1032
    %v1080 = vpack.c.b16 %v1035, %v1034
    %v1081 = vpack.c.b16 %v1037, %v1036
    %v1082 = vpack.c.b16 %v1039, %v1038
    %v1083 = vpack.c.b16 %v1041, %v1040
    %v1084 = vpack.c.b16 %v1043, %v1042
    %v1085 = vpack.c.b16 %v1045, %v1044
    %v1086 = vpack.c.b16 %v1047, %v1046
    %v1087 = vpack.c.b16 %v1049, %v1048
    %v1088 = vpack.c.b16 %v1051, %v1050
    %v1089 = vpack.c.b16 %v1053, %v1052
    %v1090 = vpack.c.b16 %v1055, %v1054
    %v1091 = vpack.c.b16 %v1057, %v1056
    %v1092 = vpack.c.b16 %v1059, %v1058
    %v1093 = vpack.c.b16 %v1061, %v1060
    %1126 = vmatpush.bf16.msra.mxu0 %v1069
    %1127 = vmatpush.bf16.msra.mxu0 %v1068
    %1128 = vmatpush.bf16.msra.mxu0 %v1067
    %1129 = vmatpush.bf16.msra.mxu0 %v1066
    %1130 = vmatpush.bf16.msra.mxu0 %v1065
    %1131 = vmatpush.bf16.msra.mxu0 %v1064
    %1132 = vmatpush.bf16.msra.mxu0 %v1063
    %1133 = vmatpush.bf16.msra.mxu0 %v1062
    %1134 = vmatmul.bf16.gmra.mxu0 %v862
    %v1135 = vpop.f32.mrf.mxu0
    %v1136 = vadd.f32 %v662, %v1135
    %v1137 = vpop.f32.mrf.mxu0
    %v1138 = vadd.f32 %v663, %v1137
    %1139 = vmatmul.bf16.gmra.mxu0 %v866
    %v1140 = vpop.f32.mrf.mxu0
    %v1141 = vadd.f32 %v664, %v1140
    %v1142 = vpop.f32.mrf.mxu0
    %v1143 = vadd.f32 %v665, %v1142
    %1144 = vdwg.mxu0
    %1145 = vmatpush.bf16.msra.mxu0 %v1077
    %1146 = vmatpush.bf16.msra.mxu0 %v1076
    %1147 = vmatpush.bf16.msra.mxu0 %v1075
    %1148 = vmatpush.bf16.msra.mxu0 %v1074
    %1149 = vmatpush.bf16.msra.mxu0 %v1073
    %1150 = vmatpush.bf16.msra.mxu0 %v1072
    %1151 = vmatpush.bf16.msra.mxu0 %v1071
    %1152 = vmatpush.bf16.msra.mxu0 %v1070
    %1153 = vmatmul.bf16.gmra.mxu0 %v863
    %v1154 = vpop.f32.mrf.mxu0
    %v1155 = vadd.f32 %v1136, %v1154
    %v1156 = vpop.f32.mrf.mxu0
    %v1157 = vadd.f32 %v1138, %v1156
    %1158 = vmatmul.bf16.gmra.mxu0 %v867
    %v1159 = vpop.f32.mrf.mxu0
    %v1160 = vadd.f32 %v1141, %v1159
    %v1161 = vpop.f32.mrf.mxu0
    %v1162 = vadd.f32 %v1143, %v1161
    %1163 = vdwg.mxu0
    %1164 = vmatpush.bf16.msra.mxu0 %v1085
    %1165 = vmatpush.bf16.msra.mxu0 %v1084
    %1166 = vmatpush.bf16.msra.mxu0 %v1083
    %1167 = vmatpush.bf16.msra.mxu0 %v1082
    %1168 = vmatpush.bf16.msra.mxu0 %v1081
    %1169 = vmatpush.bf16.msra.mxu0 %v1080
    %1170 = vmatpush.bf16.msra.mxu0 %v1079
    %1171 = vmatpush.bf16.msra.mxu0 %v1078
    %1172 = vmatmul.bf16.gmra.mxu0 %v864
    %v1173 = vpop.f32.mrf.mxu0
    %v1174 = vadd.f32 %v1155, %v1173
    %v1175 = vpop.f32.mrf.mxu0
    %v1176 = vadd.f32 %v1157, %v1175
    %1177 = vmatmul.bf16.gmra.mxu0 %v868
    %v1178 = vpop.f32.mrf.mxu0
    %v1179 = vadd.f32 %v1160, %v1178
    %v1180 = vpop.f32.mrf.mxu0
    %v1181 = vadd.f32 %v1162, %v1180
    %1182 = vdwg.mxu0
    %1183 = vmatpush.bf16.msra.mxu0 %v1093
    %1184 = vmatpush.bf16.msra.mxu0 %v1092
    %1185 = vmatpush.bf16.msra.mxu0 %v1091
    %1186 = vmatpush.bf16.msra.mxu0 %v1090
    %1187 = vmatpush.bf16.msra.mxu0 %v1089
    %1188 = vmatpush.bf16.msra.mxu0 %v1088
    %1189 = vmatpush.bf16.msra.mxu0 %v1087
    %1190 = vmatpush.bf16.msra.mxu0 %v1086
    %1191 = vmatmul.bf16.gmra.mxu0 %v865
    %v1192 = vpop.f32.mrf.mxu0
    %v1193 = vadd.f32 %v1174, %v1192
    %v1194 = vpop.f32.mrf.mxu0
    %v1195 = vadd.f32 %v1176, %v1194
    %1196 = vmatmul.bf16.gmra.mxu0 %v869
    %v1197 = vpop.f32.mrf.mxu0
    %v1198 = vadd.f32 %v1179, %v1197
    %v1199 = vpop.f32.mrf.mxu0
    %v1200 = vadd.f32 %v1181, %v1199
    %1201 = vdwg.mxu0
    %v1202 = vsel %vm94, %v1193, 0.0
    %1203 = vadd.xlane.f32.xlu0 %v1202
    %v1204 = vpop.xlane.xlu0 %1203
    %v1205 = vsel %vm94, %v1195, 0.0
    %1206 = vadd.xlane.f32.xlu0 %v1205
    %v1207 = vpop.xlane.xlu0 %1206
    %v1208 = vsel %vm94, %v1198, 0.0
    %1209 = vadd.xlane.f32.xlu0 %v1208
    %v1210 = vpop.xlane.xlu0 %1209
    %v1211 = vsel %vm94, %v1200, 0.0
    %1212 = vadd.xlane.f32.xlu0 %v1211
    %v1213 = vpop.xlane.xlu0 %1212
    %v1214 = vmul.f32 %v1204, %v589
    %v1215 = vmul.f32 %v1207, %v589
    %v1216 = vmul.f32 %v1210, %v589
    %v1217 = vmul.f32 %v1213, %v589
    %v1218 = vsub.f32 %v1193, %v1214
    %v1219 = vsub.f32 %v1195, %v1215
    %v1220 = vsub.f32 %v1198, %v1216
    %v1221 = vsub.f32 %v1200, %v1217
    %v1222 = vmul.f32 %v1218, %v1218
    %v1223 = vmul.f32 %v1219, %v1219
    %v1224 = vmul.f32 %v1220, %v1220
    %v1225 = vmul.f32 %v1221, %v1221
    %v1226 = vsel %vm94, %v1222, 0.0
    %1227 = vadd.xlane.f32.xlu0 %v1226
    %v1228 = vpop.xlane.xlu0 %1227
    %v1229 = vsel %vm94, %v1223, 0.0
    %1230 = vadd.xlane.f32.xlu0 %v1229
    %v1231 = vpop.xlane.xlu0 %1230
    %v1232 = vsel %vm94, %v1224, 0.0
    %1233 = vadd.xlane.f32.xlu0 %v1232
    %v1234 = vpop.xlane.xlu0 %1233
    %v1235 = vsel %vm94, %v1225, 0.0
    %1236 = vadd.xlane.f32.xlu0 %v1235
    %v1237 = vpop.xlane.xlu0 %1236
    %v1238 = vmul.f32 %v1228, %v589
    %v1239 = vmul.f32 %v1231, %v589
    %v1240 = vmul.f32 %v1234, %v589
    %v1241 = vmul.f32 %v1237, %v589
    %v1242 = vadd.f32 %v1238, 1e-05
    %v1243 = vadd.f32 %v1239, 1e-05
    %v1244 = vadd.f32 %v1240, 1e-05
    %v1245 = vadd.f32 %v1241, 1e-05
    %v1246 = vrsqrt.pop %v1242
    %v1247 = vmul.f32 %v1246, %v1242
    %v1248 = vmul.f32 %v1247, %v1246
    %v1249 = vmul.f32 0.5, %v1248
    %v1250 = vsub.f32 1.5, %v1249
    %v1251 = vmul.f32 %v1246, %v1250
    %vm1252 = vweird.f32 %v1242
    %vm1253 = vweird.f32 %v1246
    %vm1254 = vmor %vm1252, %vm1253
    %v1255 = vsel %vm1254, %v1246, %v1251
    %v1256 = vrsqrt.pop %v1243
    %v1257 = vmul.f32 %v1256, %v1243
    %v1258 = vmul.f32 %v1257, %v1256
    %v1259 = vmul.f32 0.5, %v1258
    %v1260 = vsub.f32 1.5, %v1259
    %v1261 = vmul.f32 %v1256, %v1260
    %vm1262 = vweird.f32 %v1243
    %vm1263 = vweird.f32 %v1256
    %vm1264 = vmor %vm1262, %vm1263
    %v1265 = vsel %vm1264, %v1256, %v1261
    %v1266 = vrsqrt.pop %v1244
    %v1267 = vmul.f32 %v1266, %v1244
    %v1268 = vmul.f32 %v1267, %v1266
    %v1269 = vmul.f32 0.5, %v1268
    %v1270 = vsub.f32 1.5, %v1269
    %v1271 = vmul.f32 %v1266, %v1270
    %vm1272 = vweird.f32 %v1244
    %vm1273 = vweird.f32 %v1266
    %vm1274 = vmor %vm1272, %vm1273
    %v1275 = vsel %vm1274, %v1266, %v1271
    %v1276 = vrsqrt.pop %v1245
    %v1277 = vmul.f32 %v1276, %v1245
    %v1278 = vmul.f32 %v1277, %v1276
    %v1279 = vmul.f32 0.5, %v1278
    %v1280 = vsub.f32 1.5, %v1279
    %v1281 = vmul.f32 %v1276, %v1280
    %vm1282 = vweird.f32 %v1245
    %vm1283 = vweird.f32 %v1276
    %vm1284 = vmor %vm1282, %vm1283
    %v1285 = vsel %vm1284, %v1276, %v1281
    %v1286 = vmul.f32 %v1218, %v1255
    %v1287 = vmul.f32 %v1219, %v1265
    %v1288 = vmul.f32 %v1220, %v1275
    %v1289 = vmul.f32 %v1221, %v1285
    %v1290 = vpack.c.bf16 %v1286, %v1286
    %v1291 = vpack.c.bf16 %v1287, %v1287
    %v1292 = vpack.c.bf16 %v1288, %v1288
    %v1293 = vpack.c.bf16 %v1289, %v1289
    %vm1294 = vcmask 519168
    %1295 = vst.msk [vmem:[#allocation2] sm:$0xf] %vm1294, %v1290
    %1296 = vst.msk [vmem:[#allocation2 + $0x4] sm:$0xf] %vm1294, %v1291
    %1297 = vst.msk [vmem:[#allocation2 + $0x8] sm:$0xf] %vm1294, %v1292
    %1298 = vst.msk [vmem:[#allocation2 + $0xc] sm:$0xf] %vm1294, %v1293
    %1299 = vst.msk [vmem:[#allocation4] sm:$0xff] %vm315, %v366
    %1300 = vst.msk [vmem:[#allocation4 + $0x8] sm:$0xff] %vm315, %v381
    %1301 = vst.msk [vmem:[#allocation4 + $0x10] sm:$0xff] %vm315, %v396
    %1302 = vst.msk [vmem:[#allocation4 + $0x18] sm:$0xff] %vm315, %v411
    // Predicated region
    $region26: #{tpu_custom_call.1} parent=1 // pred_check
      _
    $region27: #{tpu_custom_call.1} parent=1 // pred_check_branch
      %1304 = sbr.rel (0) target = $region29
    $region28: #{tpu_custom_call.1} parent=1 // pred_region
      %1306 = vsyncadd [#allocation3], 0
      %s1307 = sshll.u32 [#allocation2], 4
      %s1308 = int_to_ptr.vmem [resolvable:$true] %s1307
      %s1309 = sshll.u32 %s6, 4
      %s1310 = int_to_ptr.hbm [resolvable:$true] %s1309
      %1315 = dma.vmem_to_hbm [thread:$0]  %s1308, 256, %s1310, [#allocation3], 64, 64, 4
    $region29: #{tpu_custom_call.1} parent=1 // pred_fallthru
      _
    // Predicated region
    $region30: #{tpu_custom_call.1} parent=1 // pred_check
      _
    $region31: #{tpu_custom_call.1} parent=1 // pred_check_branch
      %1317 = sbr.rel (0) target = $region33
    $region32: #{tpu_custom_call.1} parent=1 // pred_region
      %1319 = vsyncadd [#allocation5], 0
      %s1320 = sshll.u32 [#allocation4], 4
      %s1321 = int_to_ptr.vmem [resolvable:$true] %s1320
      %s1322 = sshll.u32 %s7, 4
      %s1323 = int_to_ptr.hbm [resolvable:$true] %s1322
      %1328 = dma.vmem_to_hbm [thread:$0]  %s1321, 512, %s1323, [#allocation5], 128, 128, 8
    $region33: #{tpu_custom_call.1} parent=1 // pred_fallthru
      _
    // Predicated region
    $region34: #{tpu_custom_call.1} parent=1 // pred_check
      _
    $region35: #{tpu_custom_call.1} parent=1 // pred_check_branch
      %1330 = sbr.rel (0) target = $region37
    $region36: #{tpu_custom_call.1} parent=1 // pred_region
      %1332 = dma.done [#allocation3], 256
    $region37: #{tpu_custom_call.1} parent=1 // pred_fallthru
      _
    // Predicated region
    $region38: #{tpu_custom_call.1} parent=1 // pred_check
      _
    $region39: #{tpu_custom_call.1} parent=1 // pred_check_branch
      %1334 = sbr.rel (0) target = $region41
    $region40: #{tpu_custom_call.1} parent=1 // pred_region
      %1336 = dma.done [#allocation5], 512
    $region41: #{tpu_custom_call.1} parent=1 // pred_fallthru
      _
    %1337 = vsyncpa [#allocation3], 1
    %1338 = vsyncpa [#allocation5], 1

</llo_original>
